<compile_context>
chip_gen: v7x
topology: tpu7x:2x2x1
jax: 0.10.0
libtpu: 0.0.40
codegen_flags: <defaults>
</compile_context>

<pallas_src>
import jax
import jax.numpy as jnp
from jax.experimental import pallas as pl
from jax.experimental.pallas import tpu as pltpu

_LANES = 128


def _pack_factor(channel: int) -> int:
    """How many batch positions fit in one 128-lane row for this channel count."""
    if channel <= _LANES and _LANES % channel == 0:
        return _LANES // channel
    return 1


def prepare_se_weight(w: jax.Array) -> jax.Array:
    """One-time weight prep (do this at model init, NOT per forward call).

    w is the PyTorch nn.Linear weight, shape (C_out, C_in) = (C, C).
    Returns a block-diagonal (pack*C, pack*C) matrix with `pack` copies of w on
    the diagonal so the kernel can contract a lane-packed (TB, 128) activation
    tile against it in a single lane-dense MXU matmul.
    """
    channel = w.shape[0]
    pack = _pack_factor(channel)
    if pack == 1:
        return w
    return jnp.kron(jnp.eye(pack, dtype=w.dtype), w)


def _se_small_kernel(x_ref, w_ref, o_ref):
    """Fused: MXU matmul (x @ W^T) -> Hsigmoid gate (VPU) -> elementwise multiply."""
    x = x_ref[...]                                   # (TB, W) lane-dense tile
    # Contract x's lane axis against W's in-axis (i.e. x @ W^T) — no transpose op.
    y = jax.lax.dot_general(
        x, w_ref[...],
        dimension_numbers=(((1,), (1,)), ((), ())),
        preferred_element_type=jnp.float32)
    # Hsigmoid exactly as in the module: relu6(v + 3) / 3  (note: /3, not /6).
    gate = jnp.clip(y + 3.0, 0.0, 6.0) * (1.0 / 3.0)
    o_ref[...] = (x.astype(jnp.float32) * gate).astype(o_ref.dtype)


def se_module_small(x: jax.Array, w_packed: jax.Array, *, block_rows: int = 1024):
    """x: (..., C); w_packed: output of prepare_se_weight(w) with w of shape (C, C)."""
    orig_shape = x.shape
    C = orig_shape[-1]
    x = x.reshape(-1, C)                             # nn.Linear broadcasts over leading dims
    B = x.shape[0]

    pack = _pack_factor(C)
    W = C * pack                                     # lane width of packed problem
    assert w_packed.shape == (W, W), "weight must come from prepare_se_weight"

    # Pad batch so it reshapes into lane-dense (R, W) rows (padded rows are zero,
    # gate to 1, output 0, and are sliced off below).
    B_pad = ((B + pack - 1) // pack) * pack
    if B_pad != B:
        x = jnp.pad(x, ((0, B_pad - B), (0, 0)))
    x2 = x.reshape(B_pad // pack, W)                 # contiguous reshape: lane-dense slab
    R = x2.shape[0]

    # Row tile: biggest sensible block.  Partial tiles keep sublane (8) alignment;
    # if the whole problem is smaller than one tile, the block equals the full extent.
    tb = min(block_rows, R)
    if tb < R:
        tb = max(8, (tb // 8) * 8)                   # (8,128) block-shape constraint
    grid = (pl.cdiv(R, tb),)

    out2 = pl.pallas_call(
        _se_small_kernel,
        out_shape=jax.ShapeDtypeStruct((R, W), x.dtype),
        grid=grid,
        in_specs=[
            pl.BlockSpec((tb, W), lambda i: (i, 0)),   # activations stream through VMEM
            pl.BlockSpec((W, W), lambda i: (0, 0)),    # packed weight stays resident
        ],
        out_specs=pl.BlockSpec((tb, W), lambda i: (i, 0)),
        compiler_params=pltpu.CompilerParams(
            dimension_semantics=("parallel",)),        # v7x: shard tiles across both TCs
    )(x2, w_packed)

    out = out2.reshape(B_pad, C)
    if B_pad != B:
        out = out[:B]
    return out.reshape(orig_shape)


def _reference(x, w):
    y = jnp.clip(x @ w.T + 3.0, 0.0, 6.0) / 3.0
    return x * y


if __name__ == "__main__":
    key = jax.random.PRNGKey(0)
    k_x, k_w = jax.random.split(key)

    batch, channel = 64, 32
    x = jax.random.normal(k_x, (batch, channel), dtype=jnp.float32)
    # Deterministic init mimicking nn.Linear default (kaiming-uniform-ish bound).
    bound = 1.0 / (channel ** 0.5)
    w = jax.random.uniform(k_w, (channel, channel), dtype=jnp.float32,
                           minval=-bound, maxval=bound)

    # One-time weight prep (equivalent of doing it at model init).
    w_packed = prepare_se_weight(w)

    out = se_module_small(x, w_packed)
    jax.block_until_ready(out)
    ref = _reference(x, w)
    assert out.shape == x.shape
    assert jnp.allclose(out, ref, atol=1e-5, rtol=1e-5), "mismatch vs reference"

    # Multi-block grid + ragged batch (B not a multiple of pack/tile).
    x_r = jax.random.normal(jax.random.PRNGKey(1), (50, channel), dtype=jnp.float32)
    out_r = se_module_small(x_r, w_packed, block_rows=8)
    jax.block_until_ready(out_r)
    assert jnp.allclose(out_r, _reference(x_r, w), atol=1e-5, rtol=1e-5), "ragged mismatch"

    # Leading-dims broadcast, as nn.Linear supports (B, T, C) inputs.
    x_3d = jax.random.normal(jax.random.PRNGKey(2), (2, 9, channel), dtype=jnp.float32)
    out_3d = se_module_small(x_3d, w_packed)
    jax.block_until_ready(out_3d)
    assert out_3d.shape == x_3d.shape
    assert jnp.allclose(out_3d, _reference(x_3d, w), atol=1e-5, rtol=1e-5), "3d mismatch"

    print("KERNEL_OK")
</pallas_src>

<mosaic_0001>
module attributes {stable_mosaic.version = 11 : i64} {
  func.func @_se_small_kernel(%arg0: i32, %arg1: memref<16x128xf32, #tpu.memory_space<vmem>>, %arg2: memref<128x128xf32, #tpu.memory_space<vmem>>, %arg3: memref<16x128xf32, #tpu.memory_space<vmem>>) attributes {dimension_semantics = [#tpu.dimension_semantics<parallel>], iteration_bounds = array<i64: 1>, scalar_prefetch = 0 : i64, scratch_operands = 0 : i64, tpu.core_type = #tpu.core_type<tc>, window_params = [{transform_indices = @transform_0, window_bounds = array<i64: 16, 128>}, {pipeline_mode = #tpu.pipeline_mode<synchronous>, transform_indices = @transform_1, window_bounds = array<i64: 128, 128>}, {transform_indices = @transform_2, window_bounds = array<i64: 16, 128>}]} {
    %c0 = arith.constant 0 : index
    %c0_0 = arith.constant 0 : index
    %0 = vector.load %arg1[%c0, %c0_0] : memref<16x128xf32, #tpu.memory_space<vmem>>, vector<16x128xf32>
    %c0_1 = arith.constant 0 : index
    %c0_2 = arith.constant 0 : index
    %1 = vector.load %arg2[%c0_1, %c0_2] : memref<128x128xf32, #tpu.memory_space<vmem>>, vector<128x128xf32>
    %cst = arith.constant dense<0.000000e+00> : vector<16x128xf32>
    %2 = tpu.matmul %0, %1, %cst {dimension_numbers = #tpu.dot_dimension_numbers<[1], [1], [0], [0], [0, 0, 1, 0], [], []>} : vector<16x128xf32>, vector<128x128xf32>, vector<16x128xf32> -> vector<16x128xf32>
    %cst_3 = arith.constant 3.000000e+00 : f32
    %3 = vector.broadcast %cst_3 : f32 to vector<16x128xf32>
    %4 = arith.addf %2, %3 : vector<16x128xf32>
    %cst_4 = arith.constant 0.000000e+00 : f32
    %cst_5 = arith.constant 6.000000e+00 : f32
    %5 = vector.broadcast %cst_4 : f32 to vector<16x128xf32>
    %6 = arith.maximumf %5, %4 : vector<16x128xf32>
    %7 = vector.broadcast %cst_5 : f32 to vector<16x128xf32>
    %8 = arith.minimumf %7, %6 : vector<16x128xf32>
    %cst_6 = arith.constant 0.333333343 : f32
    %9 = vector.broadcast %cst_6 : f32 to vector<16x128xf32>
    %10 = arith.mulf %8, %9 : vector<16x128xf32>
    %11 = arith.mulf %0, %10 : vector<16x128xf32>
    %c0_7 = arith.constant 0 : index
    %c0_8 = arith.constant 0 : index
    %12 = vector.load %arg3[%c0_7, %c0_8] : memref<16x128xf32, #tpu.memory_space<vmem>>, vector<16x128xf32>
    tpu.vector_store %arg3[%c0_7, %c0_8], %11 {strides = array<i32>} : memref<16x128xf32, #tpu.memory_space<vmem>>, vector<16x128xf32>,
    return
  }
  func.func @transform_0(%arg0: i32) -> (i32, i32) {
    %c0_i32 = arith.constant 0 : i32
    %c0_i32_0 = arith.constant 0 : i32
    return %arg0, %c0_i32 : i32, i32
  }
  func.func @transform_1(%arg0: i32) -> (i32, i32) {
    %c0_i32 = arith.constant 0 : i32
    %c0_i32_0 = arith.constant 0 : i32
    %c0_i32_1 = arith.constant 0 : i32
    return %c0_i32, %c0_i32_0 : i32, i32
  }
  func.func @transform_2(%arg0: i32) -> (i32, i32) {
    %c0_i32 = arith.constant 0 : i32
    %c0_i32_0 = arith.constant 0 : i32
    return %arg0, %c0_i32 : i32, i32
  }
}

</mosaic_0001>

<llo_original>
// kernel: tpu_custom_call.1
$region0: #{tpu_custom_call.1}
  #allocation0 [shape = 'u32[]', space=smem, size = 0x4, offset = 0x4, fixed_abs, tag = 'smem constant byte address 0x4 - core index']
  #allocation1 [shape = 'u32[144,128]{1,0:T(1,128)}', space=vmem, size = 0x12000, scoped, tag = 'internal scratch']
  %s0 = inlined_call_operand.hbm [shape: f32[16,128], index: 0, kind: input, shape index: {}]
  %s1 = inlined_call_operand.hbm [shape: f32[128,128], index: 1, kind: input, shape index: {}]
  %s2 = inlined_call_operand.hbm [shape: f32[16,128], index: 2, kind: output, shape index: {}]
  %s3 = sld [smem:[#allocation0]]
  $region26: #{tpu_custom_call.1} parent=0
    _
  %s5 = ssub.s32 1, %s3
  %s6 = scalar_select 0, %s5, %s3
  $region1: #{tpu_custom_call.1} parent=0
    #allocation2 [shape = 'u8[8192]{0}', space=vmem, size = 0x2000, scoped, tag = 'input window, operand 0, single buffered']
    #allocation3 [shape = 's32[1]{0}', space=sflag, size = 0x4, scoped, tag = 'scoped memory for tpu_custom_call.1']
    #allocation4 [shape = 's32[1]{0}', space=sflag, size = 0x4, scoped, tag = 'scoped memory for tpu_custom_call.1']
    #allocation5 [shape = 'u8[65536]{0}', space=vmem, size = 0x10000, scoped, tag = 'input window, operand 1, single buffered']
    #allocation6 [shape = 's32[1]{0}', space=sflag, size = 0x4, scoped, tag = 'scoped memory for tpu_custom_call.1']
    #allocation7 [shape = 'u8[8192]{0}', space=vmem, size = 0x2000, scoped, tag = 'output window, operand 0, single buffered']
    %7 = vsyncpa [#allocation3], 0
    %8 = vsyncpa [#allocation6], 0
    %9 = vsyncpa [#allocation4], 0
    // Predicated region
    $region2: #{tpu_custom_call.1} parent=1 // pred_check
      _
    $region3: #{tpu_custom_call.1} parent=1 // pred_check_branch
      %11 = sbr.rel (0) target = $region5
    $region4: #{tpu_custom_call.1} parent=1 // pred_region
      %s13 = ssub.s32 256, 256
      %14 = vsyncadd [#allocation3], %s13
      %s15 = sshll.u32 [#allocation2], 4
      %s16 = int_to_ptr.vmem [resolvable:$true] %s15
      %21 = dma.hbm_to_vmem [thread:$0]  %s0, 256, %s16, [#allocation3], 128, 128, 8
    $region5: #{tpu_custom_call.1} parent=1 // pred_fallthru
      _
    // Predicated region
    $region6: #{tpu_custom_call.1} parent=1 // pred_check
      _
    $region7: #{tpu_custom_call.1} parent=1 // pred_check_branch
      %23 = sbr.rel (0) target = $region9
    $region8: #{tpu_custom_call.1} parent=1 // pred_region
      %s25 = ssub.s32 2048, 2048
      %26 = vsyncadd [#allocation6], %s25
      %s27 = sshll.u32 [#allocation5], 4
      %s28 = int_to_ptr.vmem [resolvable:$true] %s27
      %33 = dma.hbm_to_vmem [thread:$0]  %s1, 2048, %s28, [#allocation6], 128, 128, 8
    $region9: #{tpu_custom_call.1} parent=1 // pred_fallthru
      _
    // Predicated region
    $region10: #{tpu_custom_call.1} parent=1 // pred_check
      _
    $region11: #{tpu_custom_call.1} parent=1 // pred_check_branch
      %35 = sbr.rel (0) target = $region13
    $region12: #{tpu_custom_call.1} parent=1 // pred_region
      %36 = dma.done [#allocation3], 256
    $region13: #{tpu_custom_call.1} parent=1 // pred_fallthru
      _
    // Predicated region
    $region14: #{tpu_custom_call.1} parent=1 // pred_check
      _
    $region15: #{tpu_custom_call.1} parent=1 // pred_check_branch
      %38 = sbr.rel (0) target = $region17
    $region16: #{tpu_custom_call.1} parent=1 // pred_region
      %39 = dma.done [#allocation6], 2048
    $region17: #{tpu_custom_call.1} parent=1 // pred_fallthru
      _
    %v40 = vld [vmem:[#allocation2] sm:$0xff]
    %v41 = vld [vmem:[#allocation2 + $0x8] sm:$0xff]
    %v42 = vld [vmem:[#allocation5] sm:$0xff]
    %v43 = vld [vmem:[#allocation5 + $0x8] sm:$0xff]
    %v44 = vld [vmem:[#allocation5 + $0x10] sm:$0xff]
    %v45 = vld [vmem:[#allocation5 + $0x18] sm:$0xff]
    %v46 = vld [vmem:[#allocation5 + $0x20] sm:$0xff]
    %v47 = vld [vmem:[#allocation5 + $0x28] sm:$0xff]
    %v48 = vld [vmem:[#allocation5 + $0x30] sm:$0xff]
    %v49 = vld [vmem:[#allocation5 + $0x38] sm:$0xff]
    %v50 = vld [vmem:[#allocation5 + $0x40] sm:$0xff]
    %v51 = vld [vmem:[#allocation5 + $0x48] sm:$0xff]
    %v52 = vld [vmem:[#allocation5 + $0x50] sm:$0xff]
    %v53 = vld [vmem:[#allocation5 + $0x58] sm:$0xff]
    %v54 = vld [vmem:[#allocation5 + $0x60] sm:$0xff]
    %v55 = vld [vmem:[#allocation5 + $0x68] sm:$0xff]
    %v56 = vld [vmem:[#allocation5 + $0x70] sm:$0xff]
    %v57 = vld [vmem:[#allocation5 + $0x78] sm:$0xff]
    %58 = vmatprep.subr.mxu0 0.0
    %59 = vmatpush1.xpose.msra.mxu0 %v42
    %60 = vmatprep.subr.mxu0 0.0
    %61 = vmatpush1.xpose.msra.mxu0 %v43
    %62 = vmatprep.subr.mxu0 0.0
    %63 = vmatpush1.xpose.msra.mxu0 %v44
    %64 = vmatprep.subr.mxu0 0.0
    %65 = vmatpush1.xpose.msra.mxu0 %v45
    %66 = vmatprep.subr.mxu0 0.0
    %67 = vmatpush1.xpose.msra.mxu0 %v46
    %68 = vmatprep.subr.mxu0 0.0
    %69 = vmatpush1.xpose.msra.mxu0 %v47
    %70 = vmatprep.subr.mxu0 0.0
    %71 = vmatpush1.xpose.msra.mxu0 %v48
    %72 = vmatprep.subr.mxu0 0.0
    %73 = vmatpush1.xpose.msra.mxu0 %v49
    %74 = vmatprep.subr.mxu0 0.0
    %75 = vmatpush1.xpose.msra.mxu0 %v50
    %76 = vmatprep.subr.mxu0 0.0
    %77 = vmatpush1.xpose.msra.mxu0 %v51
    %78 = vmatprep.subr.mxu0 0.0
    %79 = vmatpush1.xpose.msra.mxu0 %v52
    %80 = vmatprep.subr.mxu0 0.0
    %81 = vmatpush1.xpose.msra.mxu0 %v53
    %82 = vmatprep.subr.mxu0 0.0
    %83 = vmatpush1.xpose.msra.mxu0 %v54
    %84 = vmatprep.subr.mxu0 0.0
    %85 = vmatpush1.xpose.msra.mxu0 %v55
    %86 = vmatprep.subr.mxu0 0.0
    %87 = vmatpush1.xpose.msra.mxu0 %v56
    %88 = vmatprep.subr.mxu0 0.0
    %89 = vmatpush1.xpose.msra.mxu0 %v57
    %90 = vmatprep.subr.mxu0 0.0
    %91 = vmatpush1.xpose.msra.mxu0 0.0
    %92 = vmatprep.subr.mxu0 0.0
    %93 = vmatpush1.xpose.msra.mxu0 0.0
    %94 = vmatprep.subr.mxu0 0.0
    %95 = vmatpush1.xpose.msra.mxu0 0.0
    %96 = vmatprep.subr.mxu0 0.0
    %97 = vmatpush1.xpose.msra.mxu0 0.0
    %98 = vmatprep.subr.mxu0 0.0
    %99 = vmatpush1.xpose.msra.mxu0 0.0
    %100 = vmatprep.subr.mxu0 0.0
    %101 = vmatpush1.xpose.msra.mxu0 0.0
    %102 = vmatprep.subr.mxu0 0.0
    %103 = vmatpush1.xpose.msra.mxu0 0.0
    %104 = vmatprep.subr.mxu0 0.0
    %105 = vmatpush1.xpose.msra.mxu0 0.0
    %106 = vmatprep.subr.mxu0 0.0
    %107 = vmatpush1.xpose.msra.mxu0 0.0
    %108 = vmatprep.subr.mxu0 0.0
    %109 = vmatpush1.xpose.msra.mxu0 0.0
    %110 = vmatprep.subr.mxu0 0.0
    %111 = vmatpush1.xpose.msra.mxu0 0.0
    %112 = vmatprep.subr.mxu0 0.0
    %113 = vmatpush1.xpose.msra.mxu0 0.0
    %114 = vmatprep.subr.mxu0 0.0
    %115 = vmatpush1.xpose.msra.mxu0 0.0
    %116 = vmatprep.subr.mxu0 0.0
    %117 = vmatpush1.xpose.msra.mxu0 0.0
    %118 = vmatprep.subr.mxu0 0.0
    %119 = vmatpush1.xpose.msra.mxu0 0.0
    %120 = vmatprep.subr.mxu0 0.0
    %121 = vmatpush1.xpose.msra.mxu0 0.0
    %122 = vmatprep.mubr.f32.mxu0 0.0
    %123 = vmatmul.mubr.f32.gmra.mrb[0].mxu0 %v40
    %v124 = vpop.f32.mrb[0].mxu0
    %v125 = vadd.f32 3.0, %v124
    %v126 = vpop.f32.mrb[0].mxu0
    %127 = vmatprep.mubr.f32.mxu0 0.0
    %128 = vmatmul.mubr.f32.gmra.mrb[0].mxu0 %v41
    %v129 = vpop.f32.mrb[0].mxu0
    %v130 = vadd.f32 3.0, %v129
    %v131 = vpop.f32.mrb[0].mxu0
    %132 = vdwg.mxu0
    %v133 = vmax.f32 %v125, 0.0
    %v134 = vmax.f32 %v130, 0.0
    %v135 = vmin.f32 %v133, 6.0
    %v136 = vmin.f32 %v134, 6.0
    %v137 = vmul.f32 %v135, 0.33333334
    %v138 = vmul.f32 %v136, 0.33333334
    %v139 = vmul.f32 %v40, %v137
    %v140 = vmul.f32 %v41, %v138
    %141 = vst [vmem:[#allocation7] sm:$0xff] %v139
    %142 = vst [vmem:[#allocation7 + $0x8] sm:$0xff] %v140
    // Predicated region
    $region18: #{tpu_custom_call.1} parent=1 // pred_check
      _
    $region19: #{tpu_custom_call.1} parent=1 // pred_check_branch
      %144 = sbr.rel (0) target = $region21
    $region20: #{tpu_custom_call.1} parent=1 // pred_region
      %s146 = ssub.s32 256, 256
      %147 = vsyncadd [#allocation4], %s146
      %s148 = sshll.u32 [#allocation7], 4
      %s149 = int_to_ptr.vmem [resolvable:$true] %s148
      %154 = dma.vmem_to_hbm [thread:$0]  %s149, 256, %s2, [#allocation4], 128, 128, 8
    $region21: #{tpu_custom_call.1} parent=1 // pred_fallthru
      _
    // Predicated region
    $region22: #{tpu_custom_call.1} parent=1 // pred_check
      _
    $region23: #{tpu_custom_call.1} parent=1 // pred_check_branch
      %156 = sbr.rel (0) target = $region25
    $region24: #{tpu_custom_call.1} parent=1 // pred_region
      %157 = dma.done [#allocation4], 256
    $region25: #{tpu_custom_call.1} parent=1 // pred_fallthru
      _
    %158 = vsyncpa [#allocation3], 1
    %159 = vsyncpa [#allocation6], 1
    %160 = vsyncpa [#allocation4], 1

</llo_original>
